<compile_context>
chip_gen: v7x
topology: tpu7x:2x2x1
jax: 0.10.0
libtpu: 0.0.40
codegen_flags: <defaults>
</compile_context>

<pallas_src>
import math

import jax
import jax.numpy as jnp
import numpy as np
from jax.experimental import pallas as pl
from jax.experimental.pallas import tpu as pltpu

EMBED_DIM = 32       # ScoreBase embed_dim default
HIDDEN = 256         # ValueFunction hidden_dim default
LN_EPS = 1e-5        # torch.nn.LayerNorm default eps
TB_MAX = 1024        # batch-tile cap (review: sweep 512-2048; 1024 fits everywhere)


def _round_up(x, m):
    return ((x + m - 1) // m) * m


def _pick_tb(B):
    """Batch tile: as large as possible (<=1024) but >=2 grid steps when B allows
    so v7x's two TensorCores both get work under dimension_semantics=("parallel",)."""
    b8 = _round_up(max(B, 8), 8)
    if b8 <= 16:
        return b8
    half = -(-b8 // 2)
    tb = _round_up(half, 128) if half >= 128 else _round_up(half, 8)
    return min(TB_MAX, tb)


# ---------------------------------------------------------------------------
# Fused kernel: embed(t) + ValueFunction(s) for one batch tile, mode-gated
# ---------------------------------------------------------------------------
def _layer_norm(x, gamma, beta):
    # two-pass form (robust with bf16 matmul inputs)
    mu = jnp.mean(x, axis=-1, keepdims=True)
    xc = x - mu
    var = jnp.mean(xc * xc, axis=-1, keepdims=True)
    return xc * jax.lax.rsqrt(var + LN_EPS) * gamma + beta


def _fused_kernel(mode_ref, s_ref, emb_pack_ref, vec_ref, w1_ref, w2_ref,
                  emb_out_ref, v_out_ref):
    # s_ref: (TB, SDIM_IN) f32, columns [0:sdim]=state, last column = t
    sfull = s_ref[...]

    # ---- embed path: GaussianFourierProjection + Linear(32, 32) -------------
    @pl.when(mode_ref[0] > 0)
    def _embed_path():
        ep = emb_pack_ref[...]                     # (2+EMBED_DIM, EMBED_DIM+1) f32
        t = sfull[:, -1:]                          # (TB, 1) time column (f32)
        # row 0: [W,W]*2pi (bias lane = 0); row 1: phase [0..,pi/2..,pi/2]
        proj = t * ep[0:1, :] + ep[1:2, :]         # (TB, 33)
        feat = jnp.sin(proj)                       # sin | cos | 1 (bias lane)
        # rows 2..: emb_w^T with bias in the last column; lane-dense (32, TB) out
        emb_cols = jax.lax.dot_general(
            ep[2:, :], feat, (((1,), (1,)), ((), ())),
            preferred_element_type=jnp.float32)    # (EMBED_DIM, TB)
        emb_out_ref[...] = emb_cols[None, :, :]

    # ---- value path: Linear -> LN -> ReLU (x2) -> Linear(256, 1) ------------
    @pl.when(mode_ref[1] > 0)
    def _value_path():
        vec = vec_ref[...]                         # (8, HIDDEN) packed f32 slab
        b1, g1, be1 = vec[0:1], vec[1:2], vec[2:3]
        b2, g2, be2 = vec[3:4], vec[4:5], vec[5:6]
        w3_row = vec[6:7].astype(jnp.bfloat16)     # (1, HIDDEN)
        b3 = vec[7:8, 0:1]                         # (1, 1)

        x16 = sfull.astype(jnp.bfloat16)           # t/pad columns hit zero w1 rows
        h = jnp.dot(x16, w1_ref[...], preferred_element_type=jnp.float32) + b1
        h = jnp.maximum(_layer_norm(h, g1, be1), 0.0)
        h = jnp.dot(h.astype(jnp.bfloat16), w2_ref[...],
                    preferred_element_type=jnp.float32) + b2
        h = jnp.maximum(_layer_norm(h, g2, be2), 0.0)
        # final 256->1 as (1,256) x (TB,256)^T -> lane-dense (1, TB)
        v_row = jax.lax.dot_general(
            w3_row, h.astype(jnp.bfloat16), (((1,), (1,)), ((), ())),
            preferred_element_type=jnp.float32)
        v_out_ref[...] = (v_row + b3)[None, :, :]


# ---------------------------------------------------------------------------
# Wrapper: one pallas_call, batch grid, VMEM-resident weights, mode-gated paths
# ---------------------------------------------------------------------------
def score_base_forward(t, s, params, *, tb=None, mode=(1, 1)):
    """Returns (embed(t): (B,32) or None, calculateV(s): (B,) or None)."""
    B = t.shape[0]
    assert s.shape[0] == B
    sdim = s.shape[1]
    assert sdim == params["sdim"]
    sdim_in = params["sdim_in"]

    if tb is None:
        tb = _pick_tb(B)
    b_pad = _round_up(B, tb)
    n_tiles = b_pad // tb

    # s_in: [state | zero-pad | t] — only pad batch when B % tb != 0
    pad_cols = sdim_in - sdim - 1
    cols = [s.astype(jnp.float32)]
    if pad_cols:
        cols.append(jnp.zeros((B, pad_cols), jnp.float32))
    cols.append(t.astype(jnp.float32).reshape(B, 1))
    s_in = jnp.concatenate(cols, axis=-1)
    if b_pad != B:
        s_in = jnp.pad(s_in, ((0, b_pad - B), (0, 0)))

    mode_arr = jnp.asarray(mode, dtype=jnp.int32)   # (2,) [do_embed, do_value]

    emb_rows, v_rows = pl.pallas_call(
        _fused_kernel,
        out_shape=(
            jax.ShapeDtypeStruct((n_tiles, EMBED_DIM, tb), jnp.float32),
            jax.ShapeDtypeStruct((n_tiles, 1, tb), jnp.float32),
        ),
        grid_spec=pltpu.PrefetchScalarGridSpec(
            num_scalar_prefetch=1,
            grid=(n_tiles,),
            in_specs=[
                pl.BlockSpec((tb, sdim_in), lambda i, m: (i, 0)),          # s|t tile
                pl.BlockSpec((2 + EMBED_DIM, EMBED_DIM + 1),
                             lambda i, m: (0, 0)),                         # embed slab
                pl.BlockSpec((8, HIDDEN), lambda i, m: (0, 0)),            # vec slab
                pl.BlockSpec((sdim_in, HIDDEN), lambda i, m: (0, 0)),      # w1 (bf16)
                pl.BlockSpec((HIDDEN, HIDDEN), lambda i, m: (0, 0)),       # w2 (bf16)
            ],
            out_specs=(
                pl.BlockSpec((1, EMBED_DIM, tb), lambda i, m: (i, 0, 0)),  # embed (lane-dense)
                pl.BlockSpec((1, 1, tb), lambda i, m: (i, 0, 0)),          # value (lane-dense)
            ),
        ),
        compiler_params=pltpu.CompilerParams(
            dimension_semantics=("parallel",),     # shard batch tiles across TCs
            vmem_limit_bytes=32 * 1024 * 1024,     # ample; footprint is a few MiB
        ),
    )(mode_arr, s_in, params["emb_pack"], params["vec"],
      params["w1_pad"], params["w2_bf"])

    emb = None
    if mode[0]:
        emb = jnp.transpose(emb_rows, (0, 2, 1)).reshape(b_pad, EMBED_DIM)[:B]
    v = None
    if mode[1]:
        v = v_rows.reshape(b_pad)[:B]
    return emb, v


def time_embed(t, params):
    """ScoreBase.embed(t): (B,) -> (B,32). Value MLP is skipped via pl.when."""
    B = t.shape[0]
    s_dummy = jnp.zeros((B, params["sdim"]), jnp.float32)
    emb, _ = score_base_forward(t, s_dummy, params, mode=(1, 0))
    return emb


def calculate_v(s, params):
    """ScoreBase.calculateV(s): (B,sdim) -> (B,). Embed path is skipped via pl.when."""
    B = s.shape[0]
    t_dummy = jnp.zeros((B,), jnp.float32)
    _, v = score_base_forward(t_dummy, s, params, mode=(0, 1))
    return v


# ---------------------------------------------------------------------------
# Deterministic parameter init (shapes from the module __init__) + packing
# ---------------------------------------------------------------------------
def init_params(key, sdim):
    ks = jax.random.split(key, 5)

    def linear(k, fin, fout):
        kw, kb = jax.random.split(k)
        bound = 1.0 / math.sqrt(fin)
        w = jax.random.uniform(kw, (fin, fout), jnp.float32, -bound, bound)
        b = jax.random.uniform(kb, (fout,), jnp.float32, -bound, bound)
        return w, b

    half = EMBED_DIM // 2
    gfp_w = jax.random.normal(ks[0], (half,), jnp.float32) * 30.0
    emb_w, emb_b = linear(ks[1], EMBED_DIM, EMBED_DIM)
    w1, b1 = linear(ks[2], sdim, HIDDEN)
    w2, b2 = linear(ks[3], HIDDEN, HIDDEN)
    w3, b3 = linear(ks[4], HIDDEN, 1)
    g1 = jnp.ones((HIDDEN,), jnp.float32)
    be1 = jnp.zeros((HIDDEN,), jnp.float32)
    g2 = jnp.ones((HIDDEN,), jnp.float32)
    be2 = jnp.zeros((HIDDEN,), jnp.float32)

    # ---- packed layouts consumed by the kernel -----------------------------
    sdim_in = _round_up(sdim + 1, 8)     # state + t column, 8-aligned (16 for sdim=12)

    w1_pad = (jnp.zeros((sdim_in, HIDDEN), jnp.float32)
              .at[:sdim].set(w1).astype(jnp.bfloat16))      # t / pad rows are zero
    w2_bf = w2.astype(jnp.bfloat16)

    vec = jnp.zeros((8, HIDDEN), jnp.float32)
    vec = vec.at[0].set(b1).at[1].set(g1).at[2].set(be1)
    vec = vec.at[3].set(b2).at[4].set(g2).at[5].set(be2)
    vec = vec.at[6].set(w3[:, 0])
    vec = vec.at[7].set(jnp.full((HIDDEN,), b3[0], jnp.float32))

    # embed slab: row0 = [W,W]*2pi (bias lane 0), row1 = phase, rows 2.. = emb_w^T|emb_b
    emb_pack = jnp.zeros((2 + EMBED_DIM, EMBED_DIM + 1), jnp.float32)
    emb_pack = emb_pack.at[0, :half].set(gfp_w * (2.0 * math.pi))
    emb_pack = emb_pack.at[0, half:EMBED_DIM].set(gfp_w * (2.0 * math.pi))
    emb_pack = emb_pack.at[1, half:EMBED_DIM].set(math.pi / 2.0)   # cos = sin(x+pi/2)
    emb_pack = emb_pack.at[1, EMBED_DIM].set(math.pi / 2.0)        # bias lane -> sin(pi/2)=1
    emb_pack = emb_pack.at[2:, :EMBED_DIM].set(emb_w.T)
    emb_pack = emb_pack.at[2:, EMBED_DIM].set(emb_b)

    return dict(
        # raw params (for the pure-JAX references)
        gfp_w=gfp_w, emb_w=emb_w, emb_b=emb_b,
        w1=w1, b1=b1, g1=g1, be1=be1,
        w2=w2, b2=b2, g2=g2, be2=be2,
        w3=w3, b3=b3,
        # packed params + static sizes (for the kernel)
        sdim=sdim, sdim_in=sdim_in,
        w1_pad=w1_pad, w2_bf=w2_bf, vec=vec, emb_pack=emb_pack,
    )


# ---------------------------------------------------------------------------
# Pure-JAX references (for correctness check)
# ---------------------------------------------------------------------------
def ref_embed(t, p):
    proj = t[:, None] * p["gfp_w"][None, :] * 2.0 * math.pi
    feat = jnp.concatenate([jnp.sin(proj), jnp.cos(proj)], axis=-1)
    return feat @ p["emb_w"] + p["emb_b"]


def ref_value(s, p, *, bf16=False):
    def ln(x, g, b):
        mu = jnp.mean(x, -1, keepdims=True)
        var = jnp.mean((x - mu) ** 2, -1, keepdims=True)
        return (x - mu) / jnp.sqrt(var + LN_EPS) * g + b

    cast = (lambda x: x.astype(jnp.bfloat16)) if bf16 else (lambda x: x)
    h = jnp.dot(cast(s), cast(p["w1"]), preferred_element_type=jnp.float32) + p["b1"]
    h = jnp.maximum(ln(h, p["g1"], p["be1"]), 0.0)
    h = jnp.dot(cast(h), cast(p["w2"]), preferred_element_type=jnp.float32) + p["b2"]
    h = jnp.maximum(ln(h, p["g2"], p["be2"]), 0.0)
    v = jnp.dot(cast(h), cast(p["w3"]), preferred_element_type=jnp.float32) + p["b3"]
    return v[:, 0]


# ---------------------------------------------------------------------------
if __name__ == "__main__":
    # ScoreBase(input_dim, output_dim): sdim = input_dim - output_dim
    B = 8        # batch
    sdim = 12    # state (condition) dim

    key = jax.random.PRNGKey(0)
    k_p, k_t, k_s = jax.random.split(key, 3)
    params = init_params(k_p, sdim)

    t = jax.random.uniform(k_t, (B,), jnp.float32, 0.001, 1.0)   # diffusion times
    s = jax.random.normal(k_s, (B, sdim), jnp.float32)           # states

    # fused forward (both paths)
    emb, v = score_base_forward(t, s, params)
    emb, v = jax.block_until_ready((emb, v))

    emb_ref = np.asarray(ref_embed(t, params))
    v_ref_f32 = np.asarray(ref_value(s, params))
    v_ref_bf16 = np.asarray(ref_value(s, params, bf16=True))

    # embed path is f32 end-to-end
    np.testing.assert_allclose(np.asarray(emb), emb_ref, rtol=2e-3, atol=2e-3)
    # value path uses bf16 MXU matmuls (f32 accumulation): tight vs bf16-matched
    # reference, loose vs the pure-f32 module reference.
    np.testing.assert_allclose(np.asarray(v), v_ref_bf16, rtol=2e-3, atol=2e-3)
    np.testing.assert_allclose(np.asarray(v), v_ref_f32, rtol=5e-2, atol=5e-2)

    # gated single-path entry points (pl.when skips the other path)
    emb_only = jax.block_until_ready(time_embed(t, params))
    v_only = jax.block_until_ready(calculate_v(s, params))
    np.testing.assert_allclose(np.asarray(emb_only), emb_ref, rtol=2e-3, atol=2e-3)
    np.testing.assert_allclose(np.asarray(v_only), v_ref_bf16, rtol=2e-3, atol=2e-3)

    # batch that needs padding + a multi-tile grid (exercises tiling/masking)
    B2 = 20
    t2 = jax.random.uniform(jax.random.PRNGKey(1), (B2,), jnp.float32, 0.001, 1.0)
    s2 = jax.random.normal(jax.random.PRNGKey(2), (B2, sdim), jnp.float32)
    emb2, v2 = jax.block_until_ready(score_base_forward(t2, s2, params))
    np.testing.assert_allclose(np.asarray(emb2), np.asarray(ref_embed(t2, params)),
                               rtol=2e-3, atol=2e-3)
    np.testing.assert_allclose(np.asarray(v2),
                               np.asarray(ref_value(s2, params, bf16=True)),
                               rtol=2e-3, atol=2e-3)

    assert emb.shape == (B, EMBED_DIM) and v.shape == (B,)
    print("KERNEL_OK")
</pallas_src>

<mosaic_0001>
module attributes {stable_mosaic.version = 11 : i64} {
  func.func @_fused_kernel(%arg0: i32, %arg1: memref<2xi32, #tpu.memory_space<smem>>, %arg2: memref<8x16xf32, #tpu.memory_space<vmem>>, %arg3: memref<34x33xf32, #tpu.memory_space<vmem>>, %arg4: memref<8x256xf32, #tpu.memory_space<vmem>>, %arg5: memref<16x256xbf16, #tpu.memory_space<vmem>>, %arg6: memref<256x256xbf16, #tpu.memory_space<vmem>>, %arg7: memref<1x32x8xf32, #tpu.memory_space<vmem>>, %arg8: memref<1x1x8xf32, #tpu.memory_space<vmem>>) attributes {dimension_semantics = [#tpu.dimension_semantics<parallel>], iteration_bounds = array<i64: 1>, scalar_prefetch = 1 : i64, scratch_operands = 0 : i64, tpu.core_type = #tpu.core_type<tc>, window_params = [{transform_indices = @transform_0, window_bounds = array<i64: 8, 16>}, {pipeline_mode = #tpu.pipeline_mode<synchronous>, transform_indices = @transform_1, window_bounds = array<i64: 34, 33>}, {pipeline_mode = #tpu.pipeline_mode<synchronous>, transform_indices = @transform_2, window_bounds = array<i64: 8, 256>}, {pipeline_mode = #tpu.pipeline_mode<synchronous>, transform_indices = @transform_3, window_bounds = array<i64: 16, 256>}, {pipeline_mode = #tpu.pipeline_mode<synchronous>, transform_indices = @transform_4, window_bounds = array<i64: 256, 256>}, {transform_indices = @transform_5, window_bounds = array<i64: 1, 32, 8>}, {transform_indices = @transform_6, window_bounds = array<i64: 1, 1, 8>}]} {
    %c0 = arith.constant 0 : index
    %c0_0 = arith.constant 0 : index
    %0 = vector.load %arg2[%c0, %c0_0] : memref<8x16xf32, #tpu.memory_space<vmem>>, vector<8x16xf32>
    %c0_1 = arith.constant 0 : index
    %1 = memref.load %arg1[%c0_1] : memref<2xi32, #tpu.memory_space<smem>>
    %c0_i32 = arith.constant 0 : i32
    %2 = arith.cmpi sgt, %1, %c0_i32 : i32
    %3 = arith.extui %2 : i1 to i32
    %c0_i32_2 = arith.constant 0 : i32
    %4 = arith.cmpi ne, %3, %c0_i32_2 : i32
    scf.if %4 {
      %c0_5 = arith.constant 0 : index
      %c0_6 = arith.constant 0 : index
      %9 = vector.load %arg3[%c0_5, %c0_6] : memref<34x33xf32, #tpu.memory_space<vmem>>, vector<34x33xf32>
      %10 = vector.extract_strided_slice %0 {offsets = [0, 15], sizes = [8, 1], strides = [1, 1]} : vector<8x16xf32> to vector<8x1xf32>
      %11 = vector.extract_strided_slice %9 {offsets = [0, 0], sizes = [1, 33], strides = [1, 1]} : vector<34x33xf32> to vector<1x33xf32>
      %12 = vector.broadcast %10 : vector<8x1xf32> to vector<8x33xf32>
      %13 = vector.broadcast %11 : vector<1x33xf32> to vector<8x33xf32>
      %14 = arith.mulf %12, %13 : vector<8x33xf32>
      %15 = vector.extract_strided_slice %9 {offsets = [1, 0], sizes = [1, 33], strides = [1, 1]} : vector<34x33xf32> to vector<1x33xf32>
      %16 = vector.broadcast %15 : vector<1x33xf32> to vector<8x33xf32>
      %17 = arith.addf %14, %16 : vector<8x33xf32>
      %18 = math.sin %17 : vector<8x33xf32>
      %19 = vector.extract_strided_slice %9 {offsets = [2, 0], sizes = [32, 33], strides = [1, 1]} : vector<34x33xf32> to vector<32x33xf32>
      %cst = arith.constant dense<0.000000e+00> : vector<32x8xf32>
      %20 = tpu.matmul %19, %18, %cst {dimension_numbers = #tpu.dot_dimension_numbers<[1], [1], [0], [0], [0, 0, 1, 0], [], []>} : vector<32x33xf32>, vector<8x33xf32>, vector<32x8xf32> -> vector<32x8xf32>
      %21 = vector.shape_cast %20 : vector<32x8xf32> to vector<1x32x8xf32>
      %c0_7 = arith.constant 0 : index
      %c0_8 = arith.constant 0 : index
      %c0_9 = arith.constant 0 : index
      %22 = vector.load %arg7[%c0_7, %c0_8, %c0_9] : memref<1x32x8xf32, #tpu.memory_space<vmem>>, vector<1x32x8xf32>
      tpu.vector_store %arg7[%c0_7, %c0_8, %c0_9], %21 {strides = array<i32>} : memref<1x32x8xf32, #tpu.memory_space<vmem>>, vector<1x32x8xf32>,
    } else {
    }
    %c1 = arith.constant 1 : index
    %5 = memref.load %arg1[%c1] : memref<2xi32, #tpu.memory_space<smem>>
    %c0_i32_3 = arith.constant 0 : i32
    %6 = arith.cmpi sgt, %5, %c0_i32_3 : i32
    %7 = arith.extui %6 : i1 to i32
    %c0_i32_4 = arith.constant 0 : i32
    %8 = arith.cmpi ne, %7, %c0_i32_4 : i32
    scf.if %8 {
      %c0_5 = arith.constant 0 : index
      %c0_6 = arith.constant 0 : index
      %9 = vector.load %arg4[%c0_5, %c0_6] : memref<8x256xf32, #tpu.memory_space<vmem>>, vector<8x256xf32>
      %10 = vector.extract_strided_slice %9 {offsets = [0, 0], sizes = [1, 256], strides = [1, 1]} : vector<8x256xf32> to vector<1x256xf32>
      %11 = vector.extract_strided_slice %9 {offsets = [1, 0], sizes = [1, 256], strides = [1, 1]} : vector<8x256xf32> to vector<1x256xf32>
      %12 = vector.extract_strided_slice %9 {offsets = [2, 0], sizes = [1, 256], strides = [1, 1]} : vector<8x256xf32> to vector<1x256xf32>
      %13 = vector.extract_strided_slice %9 {offsets = [3, 0], sizes = [1, 256], strides = [1, 1]} : vector<8x256xf32> to vector<1x256xf32>
      %14 = vector.extract_strided_slice %9 {offsets = [4, 0], sizes = [1, 256], strides = [1, 1]} : vector<8x256xf32> to vector<1x256xf32>
      %15 = vector.extract_strided_slice %9 {offsets = [5, 0], sizes = [1, 256], strides = [1, 1]} : vector<8x256xf32> to vector<1x256xf32>
      %16 = vector.extract_strided_slice %9 {offsets = [6, 0], sizes = [1, 256], strides = [1, 1]} : vector<8x256xf32> to vector<1x256xf32>
      %17 = arith.truncf %16 : vector<1x256xf32> to vector<1x256xbf16>
      %18 = vector.extract_strided_slice %9 {offsets = [7, 0], sizes = [1, 1], strides = [1, 1]} : vector<8x256xf32> to vector<1x1xf32>
      %19 = arith.truncf %0 : vector<8x16xf32> to vector<8x16xbf16>
      %c0_7 = arith.constant 0 : index
      %c0_8 = arith.constant 0 : index
      %20 = vector.load %arg5[%c0_7, %c0_8] : memref<16x256xbf16, #tpu.memory_space<vmem>>, vector<16x256xbf16>
      %cst = arith.constant dense<0.000000e+00> : vector<8x256xf32>
      %21 = tpu.matmul %19, %20, %cst {dimension_numbers = #tpu.dot_dimension_numbers<[1], [0], [0], [1], [0, 0, 1, 1], [], []>} : vector<8x16xbf16>, vector<16x256xbf16>, vector<8x256xf32> -> vector<8x256xf32>
      %22 = vector.broadcast %10 : vector<1x256xf32> to vector<8x256xf32>
      %23 = arith.addf %21, %22 : vector<8x256xf32>
      %cst_9 = arith.constant dense<0.000000e+00> : vector<8xf32>
      %24 = vector.multi_reduction <add>, %23, %cst_9 [1] : vector<8x256xf32> to vector<8xf32>
      %25 = vector.shape_cast %24 : vector<8xf32> to vector<8x1xf32>
      %cst_10 = arith.constant 2.560000e+02 : f32
      %26 = vector.broadcast %cst_10 : f32 to vector<8x1xf32>
      %27 = arith.divf %25, %26 : vector<8x1xf32>
      %28 = vector.broadcast %27 : vector<8x1xf32> to vector<8x256xf32>
      %29 = arith.subf %23, %28 : vector<8x256xf32>
      %30 = arith.mulf %29, %29 : vector<8x256xf32>
      %cst_11 = arith.constant dense<0.000000e+00> : vector<8xf32>
      %31 = vector.multi_reduction <add>, %30, %cst_11 [1] : vector<8x256xf32> to vector<8xf32>
      %32 = vector.shape_cast %31 : vector<8xf32> to vector<8x1xf32>
      %cst_12 = arith.constant 2.560000e+02 : f32
      %33 = vector.broadcast %cst_12 : f32 to vector<8x1xf32>
      %34 = arith.divf %32, %33 : vector<8x1xf32>
      %cst_13 = arith.constant 9.99999974E-6 : f32
      %35 = vector.broadcast %cst_13 : f32 to vector<8x1xf32>
      %36 = arith.addf %34, %35 : vector<8x1xf32>
      %37 = math.rsqrt %36 : vector<8x1xf32>
      %38 = vector.broadcast %37 : vector<8x1xf32> to vector<8x256xf32>
      %39 = arith.mulf %29, %38 : vector<8x256xf32>
      %40 = vector.broadcast %11 : vector<1x256xf32> to vector<8x256xf32>
      %41 = arith.mulf %39, %40 : vector<8x256xf32>
      %42 = vector.broadcast %12 : vector<1x256xf32> to vector<8x256xf32>
      %43 = arith.addf %41, %42 : vector<8x256xf32>
      %cst_14 = arith.constant 0.000000e+00 : f32
      %44 = vector.broadcast %cst_14 : f32 to vector<8x256xf32>
      %45 = arith.maximumf %43, %44 : vector<8x256xf32>
      %46 = arith.truncf %45 : vector<8x256xf32> to vector<8x256xbf16>
      %c0_15 = arith.constant 0 : index
      %c0_16 = arith.constant 0 : index
      %47 = vector.load %arg6[%c0_15, %c0_16] : memref<256x256xbf16, #tpu.memory_space<vmem>>, vector<256x256xbf16>
      %cst_17 = arith.constant dense<0.000000e+00> : vector<8x256xf32>
      %48 = tpu.matmul %46, %47, %cst_17 {dimension_numbers = #tpu.dot_dimension_numbers<[1], [0], [0], [1], [0, 0, 1, 1], [], []>} : vector<8x256xbf16>, vector<256x256xbf16>, vector<8x256xf32> -> vector<8x256xf32>
      %49 = vector.broadcast %13 : vector<1x256xf32> to vector<8x256xf32>
      %50 = arith.addf %48, %49 : vector<8x256xf32>
      %cst_18 = arith.constant dense<0.000000e+00> : vector<8xf32>
      %51 = vector.multi_reduction <add>, %50, %cst_18 [1] : vector<8x256xf32> to vector<8xf32>
      %52 = vector.shape_cast %51 : vector<8xf32> to vector<8x1xf32>
      %cst_19 = arith.constant 2.560000e+02 : f32
      %53 = vector.broadcast %cst_19 : f32 to vector<8x1xf32>
      %54 = arith.divf %52, %53 : vector<8x1xf32>
      %55 = vector.broadcast %54 : vector<8x1xf32> to vector<8x256xf32>
      %56 = arith.subf %50, %55 : vector<8x256xf32>
      %57 = arith.mulf %56, %56 : vector<8x256xf32>
      %cst_20 = arith.constant dense<0.000000e+00> : vector<8xf32>
      %58 = vector.multi_reduction <add>, %57, %cst_20 [1] : vector<8x256xf32> to vector<8xf32>
      %59 = vector.shape_cast %58 : vector<8xf32> to vector<8x1xf32>
      %cst_21 = arith.constant 2.560000e+02 : f32
      %60 = vector.broadcast %cst_21 : f32 to vector<8x1xf32>
      %61 = arith.divf %59, %60 : vector<8x1xf32>
      %cst_22 = arith.constant 9.99999974E-6 : f32
      %62 = vector.broadcast %cst_22 : f32 to vector<8x1xf32>
      %63 = arith.addf %61, %62 : vector<8x1xf32>
      %64 = math.rsqrt %63 : vector<8x1xf32>
      %65 = vector.broadcast %64 : vector<8x1xf32> to vector<8x256xf32>
      %66 = arith.mulf %56, %65 : vector<8x256xf32>
      %67 = vector.broadcast %14 : vector<1x256xf32> to vector<8x256xf32>
      %68 = arith.mulf %66, %67 : vector<8x256xf32>
      %69 = vector.broadcast %15 : vector<1x256xf32> to vector<8x256xf32>
      %70 = arith.addf %68, %69 : vector<8x256xf32>
      %cst_23 = arith.constant 0.000000e+00 : f32
      %71 = vector.broadcast %cst_23 : f32 to vector<8x256xf32>
      %72 = arith.maximumf %70, %71 : vector<8x256xf32>
      %73 = arith.truncf %72 : vector<8x256xf32> to vector<8x256xbf16>
      %cst_24 = arith.constant dense<0.000000e+00> : vector<1x8xf32>
      %74 = tpu.matmul %17, %73, %cst_24 {dimension_numbers = #tpu.dot_dimension_numbers<[1], [1], [0], [0], [0, 0, 1, 0], [], []>} : vector<1x256xbf16>, vector<8x256xbf16>, vector<1x8xf32> -> vector<1x8xf32>
      %75 = vector.broadcast %18 : vector<1x1xf32> to vector<1x8xf32>
      %76 = arith.addf %74, %75 : vector<1x8xf32>
      %77 = vector.shape_cast %76 : vector<1x8xf32> to vector<1x1x8xf32>
      %c0_25 = arith.constant 0 : index
      %c0_26 = arith.constant 0 : index
      %c0_27 = arith.constant 0 : index
      %78 = vector.load %arg8[%c0_25, %c0_26, %c0_27] : memref<1x1x8xf32, #tpu.memory_space<vmem>>, vector<1x1x8xf32>
      tpu.vector_store %arg8[%c0_25, %c0_26, %c0_27], %77 {strides = array<i32>} : memref<1x1x8xf32, #tpu.memory_space<vmem>>, vector<1x1x8xf32>,
    } else {
    }
    return
  }
  func.func @transform_0(%arg0: i32, %arg1: memref<2xi32, #tpu.memory_space<smem>>) -> (i32, i32) {
    %c0_i32 = arith.constant 0 : i32
    %c0_i32_0 = arith.constant 0 : i32
    return %arg0, %c0_i32 : i32, i32
  }
  func.func @transform_1(%arg0: i32, %arg1: memref<2xi32, #tpu.memory_space<smem>>) -> (i32, i32) {
    %c0_i32 = arith.constant 0 : i32
    %c0_i32_0 = arith.constant 0 : i32
    %c0_i32_1 = arith.constant 0 : i32
    return %c0_i32, %c0_i32_0 : i32, i32
  }
  func.func @transform_2(%arg0: i32, %arg1: memref<2xi32, #tpu.memory_space<smem>>) -> (i32, i32) {
    %c0_i32 = arith.constant 0 : i32
    %c0_i32_0 = arith.constant 0 : i32
    %c0_i32_1 = arith.constant 0 : i32
    return %c0_i32, %c0_i32_0 : i32, i32
  }
  func.func @transform_3(%arg0: i32, %arg1: memref<2xi32, #tpu.memory_space<smem>>) -> (i32, i32) {
    %c0_i32 = arith.constant 0 : i32
    %c0_i32_0 = arith.constant 0 : i32
    %c0_i32_1 = arith.constant 0 : i32
    return %c0_i32, %c0_i32_0 : i32, i32
  }
  func.func @transform_4(%arg0: i32, %arg1: memref<2xi32, #tpu.memory_space<smem>>) -> (i32, i32) {
    %c0_i32 = arith.constant 0 : i32
    %c0_i32_0 = arith.constant 0 : i32
    %c0_i32_1 = arith.constant 0 : i32
    return %c0_i32, %c0_i32_0 : i32, i32
  }
  func.func @transform_5(%arg0: i32, %arg1: memref<2xi32, #tpu.memory_space<smem>>) -> (i32, i32, i32) {
    %c0_i32 = arith.constant 0 : i32
    %c0_i32_0 = arith.constant 0 : i32
    %c0_i32_1 = arith.constant 0 : i32
    return %arg0, %c0_i32, %c0_i32_0 : i32, i32, i32
  }
  func.func @transform_6(%arg0: i32, %arg1: memref<2xi32, #tpu.memory_space<smem>>) -> (i32, i32, i32) {
    %c0_i32 = arith.constant 0 : i32
    %c0_i32_0 = arith.constant 0 : i32
    %c0_i32_1 = arith.constant 0 : i32
    return %arg0, %c0_i32, %c0_i32_0 : i32, i32, i32
  }
}

</mosaic_0001>

<llo_original>
// kernel: tpu_custom_call.1
$region0: #{tpu_custom_call.1}
  #allocation0 [shape = 'u32[]', space=smem, size = 0x4, offset = 0x4, fixed_abs, tag = 'smem constant byte address 0x4 - core index']
  #allocation1 [shape = 'u32[144,128]{1,0:T(1,128)}', space=vmem, size = 0x12000, scoped, tag = 'internal scratch']
  #allocation2 [shape = 's32[1]{0}', space=sflag, size = 0x4, scoped, tag = 'scoped memory for tpu_custom_call.1']
  #allocation3 [shape = 'u8[512]{0}', space=smem, size = 0x200, scoped, tag = 'prefetched SMEM operand 0']
  %s0 = inlined_call_operand.hbm [shape: s32[2], index: 0, kind: input, shape index: {}]
  %s1 = inlined_call_operand.hbm [shape: f32[8,16], index: 1, kind: input, shape index: {}]
  %s2 = inlined_call_operand.hbm [shape: f32[34,33], index: 2, kind: input, shape index: {}]
  %s3 = inlined_call_operand.hbm [shape: f32[8,256], index: 3, kind: input, shape index: {}]
  %s4 = inlined_call_operand.hbm [shape: bf16[16,256], index: 4, kind: input, shape index: {}]
  %s5 = inlined_call_operand.hbm [shape: bf16[256,256], index: 5, kind: input, shape index: {}]
  %s6 = inlined_call_operand.vmem [shape: f32[1,32,8], index: 6, kind: output, shape index: {0}]
  %s7 = inlined_call_operand.hbm [shape: f32[1,1,8], index: 7, kind: output, shape index: {1}]
  %8 = xla_tuple %s6, %s7
  %s9 = sld [smem:[#allocation0]]
  $region66: #{tpu_custom_call.1} parent=0
    _
  %s11 = ssub.s32 1, %s9
  %s12 = scalar_select 0, %s11, %s9
  %14 = dma.hbm_to_smem %s0, 16, [#allocation3], [#allocation2]
  %15 = dma.done [#allocation2], 16
  %16 = sfence
  $region1: #{tpu_custom_call.1} parent=0
    #allocation4 [shape = 'u8[4096]{0}', space=vmem, size = 0x1000, scoped, tag = 'input window, operand 1, single buffered']
    #allocation5 [shape = 's32[1]{0}', space=sflag, size = 0x4, scoped, tag = 'scoped memory for tpu_custom_call.1']
    #allocation6 [shape = 's32[1]{0}', space=sflag, size = 0x4, scoped, tag = 'scoped memory for tpu_custom_call.1']
    #allocation7 [shape = 'u8[20480]{0}', space=vmem, size = 0x5000, scoped, tag = 'input window, operand 2, single buffered']
    #allocation8 [shape = 's32[1]{0}', space=sflag, size = 0x4, scoped, tag = 'scoped memory for tpu_custom_call.1']
    #allocation9 [shape = 'u8[8192]{0}', space=vmem, size = 0x2000, scoped, tag = 'input window, operand 3, single buffered']
    #allocation10 [shape = 'u8[8192]{0}', space=vmem, size = 0x2000, scoped, tag = 'input window, operand 4, single buffered']
    #allocation11 [shape = 's32[1]{0}', space=sflag, size = 0x4, scoped, tag = 'scoped memory for tpu_custom_call.1']
    #allocation12 [shape = 'u8[131072]{0}', space=vmem, size = 0x20000, scoped, tag = 'input window, operand 5, single buffered']
    #allocation13 [shape = 'u8[512]{0}', space=vmem, size = 0x400, scoped, tag = 'output window, operand 1, single buffered']
    %17 = vsyncpa [#allocation5], 0
    %18 = vsyncpa [#allocation8], 0
    %19 = vsyncpa [#allocation11], 0
    %20 = vsyncpa [#allocation6], 0
    // Predicated region
    $region2: #{tpu_custom_call.1} parent=1 // pred_check
      _
    $region3: #{tpu_custom_call.1} parent=1 // pred_check_branch
      %22 = sbr.rel (0) target = $region5
    $region4: #{tpu_custom_call.1} parent=1 // pred_region
      %s24 = ssub.s32 128, 128
      %25 = vsyncadd [#allocation5], %s24
      %s27 = sshll.u32 [#allocation4], 4
      %s28 = int_to_ptr.vmem [resolvable:$true] %s27
      %30 = dma.hbm_to_vmem [thread:$0]  %s1, 128, %s28, [#allocation5]
    $region5: #{tpu_custom_call.1} parent=1 // pred_fallthru
      _
    // Predicated region
    $region6: #{tpu_custom_call.1} parent=1 // pred_check
      _
    $region7: #{tpu_custom_call.1} parent=1 // pred_check_branch
      %32 = sbr.rel (0) target = $region9
    $region8: #{tpu_custom_call.1} parent=1 // pred_region
      %s34 = ssub.s32 640, 640
      %35 = vsyncadd [#allocation8], %s34
      %s36 = sshll.u32 [#allocation7], 4
      %s37 = int_to_ptr.vmem [resolvable:$true] %s36
      %42 = dma.hbm_to_vmem [thread:$0]  %s2, 640, %s37, [#allocation8], 128, 128, 8
    $region9: #{tpu_custom_call.1} parent=1 // pred_fallthru
      _
    // Predicated region
    $region10: #{tpu_custom_call.1} parent=1 // pred_check
      _
    $region11: #{tpu_custom_call.1} parent=1 // pred_check_branch
      %44 = sbr.rel (0) target = $region13
    $region12: #{tpu_custom_call.1} parent=1 // pred_region
      %s46 = ssub.s32 256, 256
      %47 = vsyncadd [#allocation8], %s46
      %s49 = sshll.u32 [#allocation9], 4
      %s50 = int_to_ptr.vmem [resolvable:$true] %s49
      %52 = dma.hbm_to_vmem [thread:$0]  %s3, 256, %s50, [#allocation8]
    $region13: #{tpu_custom_call.1} parent=1 // pred_fallthru
      _
    // Predicated region
    $region14: #{tpu_custom_call.1} parent=1 // pred_check
      _
    $region15: #{tpu_custom_call.1} parent=1 // pred_check_branch
      %54 = sbr.rel (0) target = $region17
    $region16: #{tpu_custom_call.1} parent=1 // pred_region
      %s56 = ssub.s32 256, 256
      %57 = vsyncadd [#allocation11], %s56
      %s58 = sshll.u32 [#allocation10], 4
      %s59 = int_to_ptr.vmem [resolvable:$true] %s58
      %64 = dma.hbm_to_vmem [thread:$0]  %s4, 256, %s59, [#allocation11], 128, 128, 8
    $region17: #{tpu_custom_call.1} parent=1 // pred_fallthru
      _
    // Predicated region
    $region18: #{tpu_custom_call.1} parent=1 // pred_check
      _
    $region19: #{tpu_custom_call.1} parent=1 // pred_check_branch
      %66 = sbr.rel (0) target = $region21
    $region20: #{tpu_custom_call.1} parent=1 // pred_region
      %s68 = ssub.s32 4096, 4096
      %69 = vsyncadd [#allocation11], %s68
      %s70 = sshll.u32 [#allocation12], 4
      %s71 = int_to_ptr.vmem [resolvable:$true] %s70
      %76 = dma.hbm_to_vmem [thread:$0]  %s5, 4096, %s71, [#allocation11], 128, 128, 8
    $region21: #{tpu_custom_call.1} parent=1 // pred_fallthru
      _
    // Predicated region
    $region22: #{tpu_custom_call.1} parent=1 // pred_check
      _
    $region23: #{tpu_custom_call.1} parent=1 // pred_check_branch
      %78 = sbr.rel (0) target = $region25
    $region24: #{tpu_custom_call.1} parent=1 // pred_region
      %79 = dma.done [#allocation5], 128
    $region25: #{tpu_custom_call.1} parent=1 // pred_fallthru
      _
    // Predicated region
    $region26: #{tpu_custom_call.1} parent=1 // pred_check
      _
    $region27: #{tpu_custom_call.1} parent=1 // pred_check_branch
      %81 = sbr.rel (0) target = $region29
    $region28: #{tpu_custom_call.1} parent=1 // pred_region
      %82 = dma.done [#allocation8], 640
    $region29: #{tpu_custom_call.1} parent=1 // pred_fallthru
      _
    // Predicated region
    $region30: #{tpu_custom_call.1} parent=1 // pred_check
      _
    $region31: #{tpu_custom_call.1} parent=1 // pred_check_branch
      %84 = sbr.rel (0) target = $region33
    $region32: #{tpu_custom_call.1} parent=1 // pred_region
      %85 = dma.done [#allocation8], 256
    $region33: #{tpu_custom_call.1} parent=1 // pred_fallthru
      _
    // Predicated region
    $region34: #{tpu_custom_call.1} parent=1 // pred_check
      _
    $region35: #{tpu_custom_call.1} parent=1 // pred_check_branch
      %87 = sbr.rel (0) target = $region37
    $region36: #{tpu_custom_call.1} parent=1 // pred_region
      %88 = dma.done [#allocation11], 256
    $region37: #{tpu_custom_call.1} parent=1 // pred_fallthru
      _
    // Predicated region
    $region38: #{tpu_custom_call.1} parent=1 // pred_check
      _
    $region39: #{tpu_custom_call.1} parent=1 // pred_check_branch
      %90 = sbr.rel (0) target = $region41
    $region40: #{tpu_custom_call.1} parent=1 // pred_region
      %91 = dma.done [#allocation11], 4096
    $region41: #{tpu_custom_call.1} parent=1 // pred_fallthru
      _
    %v93 = vld [vmem:[#allocation4] sm:$0xff]
    %s94 = sld [smem:[#allocation3]]
    %p95 = scmp.gt.s32.totalorder %s94, 0
    // Predicated region
    $region42: #{tpu_custom_call.1} parent=1 // pred_check
      %p96 = pneg %p95
    $region43: #{tpu_custom_call.1} parent=1 // pred_check_branch
      %98 = sbr.rel (%p96) target = $region45
    $region44: #{tpu_custom_call.1} parent=1 // pred_region
      %v99 = vld [vmem:[#allocation7] sm:$0xff]
      %v100 = vld [vmem:[#allocation7 + $0x8] sm:$0xff]
      %v101 = vld [vmem:[#allocation7 + $0x10] sm:$0xff]
      %v102 = vld [vmem:[#allocation7 + $0x18] sm:$0xff]
      %v103 = vld [vmem:[#allocation7 + $0x20] sm:$0x3]
      %105 = vset.pattern.permute.xlu0 15
      %106 = vperm.xlu0 %105, %v93
      %v107 = vpop.permute.xlu0 %106
      %v109 = vlaneseq
      %v110 = vshrl.u32 %v109, 7
      %v111 = vsub.s32 0, %v110
      %v112 = vrot.slane %v99, %v111
      %v113 = vmul.f32 %v107, %v112
      %v114 = vlaneseq
      %v115 = vshrl.u32 %v114, 7
      %v116 = vsub.s32 1, %v115
      %v117 = vrot.slane %v99, %v116
      %v118 = vadd.f32 %v113, %v117
      %v119 = vand.u32 2147483647, %v118
      %vm120 = vcmp.le.f32.partialorder %v119, 0.7853982
      %vm121 = vcmp.lt.s32.totalorder %v118, 0
      %v122 = vand.u32 %v118, 2139095040
      %v123 = vshrl.u32 %v122, 23
      %v124 = vsub.s32 %v123, 127
      %v125 = vand.u32 2147483647, %v118
      %v126 = vand.u32 %v125, 8388607
      %v127 = vor.u32 %v126, 8388608
      %v128 = vsub.s32 0, %v127
      %v129 = vadd.s32 %v124, 1
      %vm130 = vcmp.gt.s32.totalorder %v129, 0
      %v131 = vsel %vm130, %v129, 0
      %v132 = vshrl.u32 %v131, 5
      %v133 = vand.u32 %v131, 31
      %v134 = vsub.s32 32, %v133
      %v135 = vshrl.u32 683565275, %v134
      %v136 = vshll.u32 683565275, %v133
      %v137 = vshrl.u32 2475754826, %v134
      %v138 = vor.u32 %v136, %v137
      %v139 = vshll.u32 2475754826, %v133
      %v140 = vshrl.u32 2131351028, %v134
      %v141 = vor.u32 %v139, %v140
      %v142 = vshll.u32 2131351028, %v133
      %v143 = vshrl.u32 2102212464, %v134
      %v144 = vor.u32 %v142, %v143
      %v145 = vshll.u32 2102212464, %v133
      %v146 = vshrl.u32 920167782, %v134
      %v147 = vor.u32 %v145, %v146
      %v148 = vshll.u32 920167782, %v133
      %v149 = vshrl.u32 1326507024, %v134
      %v150 = vor.u32 %v148, %v149
      %vm151 = vcmp.lt.s32.totalorder %v132, 1
      %vm152 = vcmp.lt.s32.totalorder %v132, 2
      %vm153 = vcmp.lt.s32.totalorder %v132, 3
      %vm154 = vcmp.lt.s32.totalorder %v132, 4
      %v155 = vsel %vm151, %v135, %v138
      %v156 = vsel %vm154, %v144, 2102212464
      %v157 = vsel %vm153, %v141, %v156
      %v158 = vsel %vm152, %v155, %v157
      %v159 = vsel %vm151, %v138, %v141
      %v160 = vsel %vm154, %v147, 920167782
      %v161 = vsel %vm153, %v144, %v160
      %v162 = vsel %vm152, %v159, %v161
      %v163 = vsel %vm151, %v141, %v144
      %v164 = vsel %vm154, %v150, 1326507024
      %v165 = vsel %vm153, %v147, %v164
      %v166 = vsel %vm152, %v163, %v165
      %v167 = vshll.u32 %v127, 8
      %v168 = vmul.u32.u64.compose %v167, %v166
      %v169 = vextract.low.u32 %v168
      %v170 = vextract.high.u32 %v168
      %v171 = vmul.u32.u64.compose %v167, %v162
      %v172 = vextract.low.u32 %v171
      %v173 = vextract.high.u32 %v171
      %v174 = vmul.u32 %v167, %v158
      %v175 = vadd.s32 %v170, %v172
      %vm176 = vc.u32 %v170, %v172
      %v177 = vadd.s32 %v173, 1
      %v178 = vsel %vm176, %v177, %v173
      %v179 = vadd.s32 %v174, %v178
      %v180 = vadd.s32 %v179, 536870912
      %v181 = vshrl.u32 %v180, 30
      %v182 = vshll.u32 %v181, 30
      %v183 = vsub.s32 %v179, %v182
      %vm184 = vcmp.lt.s32.totalorder %v183, 0
      %v185 = vsub.s32 0, %v183
      %v186 = vsel %vm184, %v185, %v183
      %v187 = vclz %v186
      %v188 = vsub.s32 %v187, 2
      %vm189 = vcmp.gt.s32.totalorder 0, %v188
      %v190 = vsel %vm189, 0, %v188
      %v191 = vsub.s32 32, %v190
      %v192 = vshll.u32 %v183, %v190
      %v193 = vshrl.u32 %v175, %v191
      %v194 = vor.u32 %v192, %v193
      %v195 = vsub.s32 4294967266, %v190
      %v196 = vadd.s32 %v195, 127
      %v197 = vshll.u32 %v196, 23
      %v198 = vor.u32 4788187, %v197
      %v199 = vand.u32 2147483647, %v198
      %v201 = vcvt.s32.f32 %v194
      %v202 = vmul.f32 %v201, %v199
      %v203 = vxor.u32 %v202, 2147483648
      %v204 = vsel %vm121, %v203, %v202
      %v205 = vsub.s32 4, %v181
      %v206 = vsel %vm121, %v205, %v181
      %v207 = vsel %vm120, %v118, %v204
      %v208 = vsel %vm120, 0, %v206
      %v209 = vcosq.f32.pop %v207
      %v210 = vsinq.f32.pop %v207
      %vm211 = vweird.f32 %v118
      %v212 = vadd.s32 %v208, 3
      %v213 = vand.u32 %v212, 3
      %vm214 = vcmp.lt.s32.totalorder %v213, 2
      %vm215 = vcmp.eq.s32.totalorder %v213, 0
      %v216 = vxor.u32 %v210, 2147483648
      %v217 = vsel %vm215, %v209, %v216
      %vm218 = vcmp.eq.s32.totalorder %v213, 2
      %v219 = vxor.u32 %v209, 2147483648
      %v220 = vsel %vm218, %v219, %v210
      %v221 = vsel %vm214, %v217, %v220
      %v222 = vsel %vm211, nan, %v221
      %vm228 = vcmask 1045504
      %v229 = vrot.slane %v99, 2
      %v230 = vrot.slane %v100, 2
      %v231 = vsel %vm228, %v229, %v230
      %v232 = vrot.slane %v101, 2
      %v233 = vsel %vm228, %v230, %v232
      %v234 = vrot.slane %v102, 2
      %v235 = vsel %vm228, %v232, %v234
      %v236 = vrot.slane %v103, 2
      %v237 = vsel %vm228, %v234, %v236
      %vm238 = vcmask 269312
      %v239 = vsel %vm238, %v231, 0
      %v241 = vsel %vm238, %v233, 0
      %v243 = vsel %vm238, %v235, 0
      %v245 = vsel %vm238, %v237, 0
      %v248 = vsel %vm238, %v222, 0
      %250 = vmatprep.subr.mxu0 0.0
      %251 = vmatpush1.xpose.msra.mxu0 %v248
      %252 = vmatprep.subr.mxu0 0.0
      %253 = vmatpush1.xpose.msra.mxu0 0.0
      %254 = vmatprep.subr.mxu0 0.0
      %255 = vmatpush1.xpose.msra.mxu0 0.0
      %256 = vmatprep.subr.mxu0 0.0
      %257 = vmatpush1.xpose.msra.mxu0 0.0
      %258 = vmatprep.subr.mxu0 0.0
      %259 = vmatpush1.xpose.msra.mxu0 0.0
      %260 = vmatprep.subr.mxu0 0.0
      %261 = vmatpush1.xpose.msra.mxu0 0.0
      %262 = vmatprep.subr.mxu0 0.0
      %263 = vmatpush1.xpose.msra.mxu0 0.0
      %264 = vmatprep.subr.mxu0 0.0
      %265 = vmatpush1.xpose.msra.mxu0 0.0
      %266 = vmatprep.subr.mxu0 0.0
      %267 = vmatpush1.xpose.msra.mxu0 0.0
      %268 = vmatprep.subr.mxu0 0.0
      %269 = vmatpush1.xpose.msra.mxu0 0.0
      %270 = vmatprep.subr.mxu0 0.0
      %271 = vmatpush1.xpose.msra.mxu0 0.0
      %272 = vmatprep.subr.mxu0 0.0
      %273 = vmatpush1.xpose.msra.mxu0 0.0
      %274 = vmatprep.subr.mxu0 0.0
      %275 = vmatpush1.xpose.msra.mxu0 0.0
      %276 = vmatprep.subr.mxu0 0.0
      %277 = vmatpush1.xpose.msra.mxu0 0.0
      %278 = vmatprep.subr.mxu0 0.0
      %279 = vmatpush1.xpose.msra.mxu0 0.0
      %280 = vmatprep.subr.mxu0 0.0
      %281 = vmatpush1.xpose.msra.mxu0 0.0
      %282 = vmatprep.subr.mxu0 0.0
      %283 = vmatpush1.xpose.msra.mxu0 0.0
      %284 = vmatprep.subr.mxu0 0.0
      %285 = vmatpush1.xpose.msra.mxu0 0.0
      %286 = vmatprep.subr.mxu0 0.0
      %287 = vmatpush1.xpose.msra.mxu0 0.0
      %288 = vmatprep.subr.mxu0 0.0
      %289 = vmatpush1.xpose.msra.mxu0 0.0
      %290 = vmatprep.subr.mxu0 0.0
      %291 = vmatpush1.xpose.msra.mxu0 0.0
      %292 = vmatprep.subr.mxu0 0.0
      %293 = vmatpush1.xpose.msra.mxu0 0.0
      %294 = vmatprep.subr.mxu0 0.0
      %295 = vmatpush1.xpose.msra.mxu0 0.0
      %296 = vmatprep.subr.mxu0 0.0
      %297 = vmatpush1.xpose.msra.mxu0 0.0
      %298 = vmatprep.subr.mxu0 0.0
      %299 = vmatpush1.xpose.msra.mxu0 0.0
      %300 = vmatprep.subr.mxu0 0.0
      %301 = vmatpush1.xpose.msra.mxu0 0.0
      %302 = vmatprep.subr.mxu0 0.0
      %303 = vmatpush1.xpose.msra.mxu0 0.0
      %304 = vmatprep.subr.mxu0 0.0
      %305 = vmatpush1.xpose.msra.mxu0 0.0
      %306 = vmatprep.subr.mxu0 0.0
      %307 = vmatpush1.xpose.msra.mxu0 0.0
      %308 = vmatprep.subr.mxu0 0.0
      %309 = vmatpush1.xpose.msra.mxu0 0.0
      %310 = vmatprep.subr.mxu0 0.0
      %311 = vmatpush1.xpose.msra.mxu0 0.0
      %312 = vmatprep.subr.mxu0 0.0
      %313 = vmatpush1.xpose.msra.mxu0 0.0
      %314 = vmatprep.mubr.f32.mxu0 0.0
      %315 = vmatmul.mubr.f32.gmra.mrb[0].mxu0 %v239
      %v316 = vpop.f32.mrb[0].mxu0
      %v317 = vadd.f32 0.0, %v316
      %v318 = vpop.f32.mrb[0].mxu0
      %319 = vmatprep.mubr.f32.mxu0 0.0
      %320 = vmatmul.mubr.f32.gmra.mrb[0].mxu0 %v241
      %v321 = vpop.f32.mrb[0].mxu0
      %v322 = vadd.f32 0.0, %v321
      %v323 = vpop.f32.mrb[0].mxu0
      %324 = vmatprep.mubr.f32.mxu0 0.0
      %325 = vmatmul.mubr.f32.gmra.mrb[0].mxu0 %v243
      %v326 = vpop.f32.mrb[0].mxu0
      %v327 = vadd.f32 0.0, %v326
      %v328 = vpop.f32.mrb[0].mxu0
      %329 = vmatprep.mubr.f32.mxu0 0.0
      %330 = vmatmul.mubr.f32.gmra.mrb[0].mxu0 %v245
      %v331 = vpop.f32.mrb[0].mxu0
      %v332 = vadd.f32 0.0, %v331
      %v333 = vpop.f32.mrb[0].mxu0
      %334 = vdwg.mxu0
      %vm335 = vcmask 64512
      %336 = vst.msk [vmem:[%s6] sm:$0xff] %vm335, %v317
      %337 = vst.msk [vmem:[%s6 + $0x8] sm:$0xff] %vm335, %v322
      %338 = vst.msk [vmem:[%s6 + $0x10] sm:$0xff] %vm335, %v327
      %339 = vst.msk [vmem:[%s6 + $0x18] sm:$0xff] %vm335, %v332
    $region45: #{tpu_custom_call.1} parent=1 // pred_fallthru
      _
    %s340 = sld [smem:[#allocation3 + $0x1]]
    %p341 = scmp.gt.s32.totalorder %s340, 0
    // Predicated region
    $region46: #{tpu_custom_call.1} parent=1 // pred_check
      %p342 = pneg %p341
    $region47: #{tpu_custom_call.1} parent=1 // pred_check_branch
      %344 = sbr.rel (%p342) target = $region49
    $region48: #{tpu_custom_call.1} parent=1 // pred_region
      %v345 = vld [vmem:[#allocation9] sm:$0xff]
      %v346 = vld [vmem:[#allocation9 + $0x8] sm:$0xff]
      %v347 = vpack.c.bf16 %v345, %v345
      %v348 = vpack.c.bf16 %v346, %v346
      %v349 = vpack.c.bf16 %v93, %v93
      %v350 = vld [vmem:[#allocation10] sm:$0xff]
      %v351 = vld [vmem:[#allocation10 + $0x8] sm:$0xff]
      %v352 = vlaneseq
      %v353 = vshrl.u32 %v352, 7
      %v354 = vsub.s32 0, %v353
      %v355 = vrot.slane %v345, %v354
      %v356 = vlaneseq
      %v357 = vshrl.u32 %v356, 7
      %v358 = vsub.s32 0, %v357
      %v359 = vrot.slane %v346, %v358
      %v362 = vunpack.c.l.b16 %v350
      %v363 = vunpack.c.h.b16 %v350
      %v364 = vunpack.c.l.b16 %v351
      %v365 = vunpack.c.h.b16 %v351
      %v366 = vpack.c.b16 %v364, %v362
      %v367 = vpack.c.b16 %v365, %v363
      %vm370 = vcmask 130048
      %v372 = vsel %vm370, %v349, 0
      %374 = vmatprep.subr.bf16.mxu0 %v367
      %375 = vmatpush1.bf16.msra.mxu0 %v366
      %376 = vmatprep.subr.bf16.mxu0 0
      %377 = vmatpush1.bf16.msra.mxu0 0
      %378 = vmatprep.subr.bf16.mxu0 0
      %379 = vmatpush1.bf16.msra.mxu0 0
      %380 = vmatprep.subr.bf16.mxu0 0
      %381 = vmatpush1.bf16.msra.mxu0 0
      %382 = vmatprep.subr.bf16.mxu0 0
      %383 = vmatpush1.bf16.msra.mxu0 0
      %384 = vmatprep.subr.bf16.mxu0 0
      %385 = vmatpush1.bf16.msra.mxu0 0
      %386 = vmatprep.subr.bf16.mxu0 0
      %387 = vmatpush1.bf16.msra.mxu0 0
      %388 = vmatprep.subr.bf16.mxu0 0
      %389 = vmatpush1.bf16.msra.mxu0 0
      %390 = vmatprep.subr.bf16.mxu0 0
      %391 = vmatpush1.bf16.msra.mxu0 0
      %392 = vmatprep.subr.bf16.mxu0 0
      %393 = vmatpush1.bf16.msra.mxu0 0
      %394 = vmatprep.subr.bf16.mxu0 0
      %395 = vmatpush1.bf16.msra.mxu0 0
      %396 = vmatprep.subr.bf16.mxu0 0
      %397 = vmatpush1.bf16.msra.mxu0 0
      %398 = vmatprep.subr.bf16.mxu0 0
      %399 = vmatpush1.bf16.msra.mxu0 0
      %400 = vmatprep.subr.bf16.mxu0 0
      %401 = vmatpush1.bf16.msra.mxu0 0
      %402 = vmatprep.subr.bf16.mxu0 0
      %403 = vmatpush1.bf16.msra.mxu0 0
      %404 = vmatprep.subr.bf16.mxu0 0
      %405 = vmatpush1.bf16.msra.mxu0 0
      %406 = vmatprep.mubr.bf16.mxu0 0
      %407 = vmatmul.mubr.bf16.gmra.mrb[0].mxu0 %v372
      %v408 = vpop.f32.mrb[0].mxu0
      %v409 = vadd.f32 %v355, %v408
      %v410 = vpop.f32.mrb[0].mxu0
      %v411 = vadd.f32 %v359, %v410
      %v412 = vpop.f32.mrb[0].mxu0
      %v413 = vpop.f32.mrb[0].mxu0
      %414 = vdwg.mxu0
      %v415 = vadd.f32 %v409, %v411
      %416 = vadd.xlane.f32.xlu0 %v415
      %v417 = vpop.xlane.xlu0 %416
      %v418 = vrcp.pop 256.0
      %v419 = vmul.f32 %v417, %v418
      %v420 = vsub.f32 %v409, %v419
      %v421 = vsub.f32 %v411, %v419
      %v422 = vmul.f32 %v420, %v420
      %v423 = vmul.f32 %v421, %v421
      %v424 = vadd.f32 %v422, %v423
      %425 = vadd.xlane.f32.xlu0 %v424
      %v426 = vpop.xlane.xlu0 %425
      %v427 = vmul.f32 %v426, %v418
      %v428 = vadd.f32 %v427, 1e-05
      %v429 = vrsqrt.pop %v428
      %v430 = vmul.f32 %v420, %v429
      %v431 = vmul.f32 %v421, %v429
      %v432 = vlaneseq
      %v433 = vshrl.u32 %v432, 7
      %v434 = vsub.s32 1, %v433
      %v435 = vrot.slane %v345, %v434
      %v436 = vlaneseq
      %v437 = vshrl.u32 %v436, 7
      %v438 = vsub.s32 1, %v437
      %v439 = vrot.slane %v346, %v438
      %v440 = vmul.f32 %v430, %v435
      %v441 = vmul.f32 %v431, %v439
      %v442 = vlaneseq
      %v443 = vshrl.u32 %v442, 7
      %v444 = vsub.s32 2, %v443
      %v445 = vrot.slane %v345, %v444
      %v446 = vlaneseq
      %v447 = vshrl.u32 %v446, 7
      %v448 = vsub.s32 2, %v447
      %v449 = vrot.slane %v346, %v448
      %v450 = vadd.f32 %v440, %v445
      %v451 = vadd.f32 %v441, %v449
      %v452 = vmax.f32 %v450, 0.0
      %v453 = vmax.f32 %v451, 0.0
      %v454 = vpack.c.bf16 %v452, %v452
      %v455 = vpack.c.bf16 %v453, %v453
      %v456 = vld [vmem:[#allocation12] sm:$0xff]
      %v457 = vld [vmem:[#allocation12 + $0x8] sm:$0xff]
      %v458 = vld [vmem:[#allocation12 + $0x10] sm:$0xff]
      %v459 = vld [vmem:[#allocation12 + $0x18] sm:$0xff]
      %v460 = vld [vmem:[#allocation12 + $0x20] sm:$0xff]
      %v461 = vld [vmem:[#allocation12 + $0x28] sm:$0xff]
      %v462 = vld [vmem:[#allocation12 + $0x30] sm:$0xff]
      %v463 = vld [vmem:[#allocation12 + $0x38] sm:$0xff]
      %v464 = vld [vmem:[#allocation12 + $0x40] sm:$0xff]
      %v465 = vld [vmem:[#allocation12 + $0x48] sm:$0xff]
      %v466 = vld [vmem:[#allocation12 + $0x50] sm:$0xff]
      %v467 = vld [vmem:[#allocation12 + $0x58] sm:$0xff]
      %v468 = vld [vmem:[#allocation12 + $0x60] sm:$0xff]
      %v469 = vld [vmem:[#allocation12 + $0x68] sm:$0xff]
      %v470 = vld [vmem:[#allocation12 + $0x70] sm:$0xff]
      %v471 = vld [vmem:[#allocation12 + $0x78] sm:$0xff]
      %v472 = vld [vmem:[#allocation12 + $0x80] sm:$0xff]
      %v473 = vld [vmem:[#allocation12 + $0x88] sm:$0xff]
      %v474 = vld [vmem:[#allocation12 + $0x90] sm:$0xff]
      %v475 = vld [vmem:[#allocation12 + $0x98] sm:$0xff]
      %v476 = vld [vmem:[#allocation12 + $0xa0] sm:$0xff]
      %v477 = vld [vmem:[#allocation12 + $0xa8] sm:$0xff]
      %v478 = vld [vmem:[#allocation12 + $0xb0] sm:$0xff]
      %v479 = vld [vmem:[#allocation12 + $0xb8] sm:$0xff]
      %v480 = vld [vmem:[#allocation12 + $0xc0] sm:$0xff]
      %v481 = vld [vmem:[#allocation12 + $0xc8] sm:$0xff]
      %v482 = vld [vmem:[#allocation12 + $0xd0] sm:$0xff]
      %v483 = vld [vmem:[#allocation12 + $0xd8] sm:$0xff]
      %v484 = vld [vmem:[#allocation12 + $0xe0] sm:$0xff]
      %v485 = vld [vmem:[#allocation12 + $0xe8] sm:$0xff]
      %v486 = vld [vmem:[#allocation12 + $0xf0] sm:$0xff]
      %v487 = vld [vmem:[#allocation12 + $0xf8] sm:$0xff]
      %v488 = vlaneseq
      %v489 = vshrl.u32 %v488, 7
      %v490 = vsub.s32 3, %v489
      %v491 = vrot.slane %v345, %v490
      %v492 = vlaneseq
      %v493 = vshrl.u32 %v492, 7
      %v494 = vsub.s32 3, %v493
      %v495 = vrot.slane %v346, %v494
      %v528 = vunpack.c.l.b16 %v456
      %v529 = vunpack.c.h.b16 %v456
      %v530 = vunpack.c.l.b16 %v457
      %v531 = vunpack.c.h.b16 %v457
      %v532 = vunpack.c.l.b16 %v458
      %v533 = vunpack.c.h.b16 %v458
      %v534 = vunpack.c.l.b16 %v459
      %v535 = vunpack.c.h.b16 %v459
      %v536 = vunpack.c.l.b16 %v460
      %v537 = vunpack.c.h.b16 %v460
      %v538 = vunpack.c.l.b16 %v461
      %v539 = vunpack.c.h.b16 %v461
      %v540 = vunpack.c.l.b16 %v462
      %v541 = vunpack.c.h.b16 %v462
      %v542 = vunpack.c.l.b16 %v463
      %v543 = vunpack.c.h.b16 %v463
      %v544 = vunpack.c.l.b16 %v464
      %v545 = vunpack.c.h.b16 %v464
      %v546 = vunpack.c.l.b16 %v465
      %v547 = vunpack.c.h.b16 %v465
      %v548 = vunpack.c.l.b16 %v466
      %v549 = vunpack.c.h.b16 %v466
      %v550 = vunpack.c.l.b16 %v467
      %v551 = vunpack.c.h.b16 %v467
      %v552 = vunpack.c.l.b16 %v468
      %v553 = vunpack.c.h.b16 %v468
      %v554 = vunpack.c.l.b16 %v469
      %v555 = vunpack.c.h.b16 %v469
      %v556 = vunpack.c.l.b16 %v470
      %v557 = vunpack.c.h.b16 %v470
      %v558 = vunpack.c.l.b16 %v471
      %v559 = vunpack.c.h.b16 %v471
      %v560 = vunpack.c.l.b16 %v472
      %v561 = vunpack.c.h.b16 %v472
      %v562 = vunpack.c.l.b16 %v473
      %v563 = vunpack.c.h.b16 %v473
      %v564 = vunpack.c.l.b16 %v474
      %v565 = vunpack.c.h.b16 %v474
      %v566 = vunpack.c.l.b16 %v475
      %v567 = vunpack.c.h.b16 %v475
      %v568 = vunpack.c.l.b16 %v476
      %v569 = vunpack.c.h.b16 %v476
      %v570 = vunpack.c.l.b16 %v477
      %v571 = vunpack.c.h.b16 %v477
      %v572 = vunpack.c.l.b16 %v478
      %v573 = vunpack.c.h.b16 %v478
      %v574 = vunpack.c.l.b16 %v479
      %v575 = vunpack.c.h.b16 %v479
      %v576 = vunpack.c.l.b16 %v480
      %v577 = vunpack.c.h.b16 %v480
      %v578 = vunpack.c.l.b16 %v481
      %v579 = vunpack.c.h.b16 %v481
      %v580 = vunpack.c.l.b16 %v482
      %v581 = vunpack.c.h.b16 %v482
      %v582 = vunpack.c.l.b16 %v483
      %v583 = vunpack.c.h.b16 %v483
      %v584 = vunpack.c.l.b16 %v484
      %v585 = vunpack.c.h.b16 %v484
      %v586 = vunpack.c.l.b16 %v485
      %v587 = vunpack.c.h.b16 %v485
      %v588 = vunpack.c.l.b16 %v486
      %v589 = vunpack.c.h.b16 %v486
      %v590 = vunpack.c.l.b16 %v487
      %v591 = vunpack.c.h.b16 %v487
      %v592 = vpack.c.b16 %v530, %v528
      %v593 = vpack.c.b16 %v531, %v529
      %v594 = vpack.c.b16 %v534, %v532
      %v595 = vpack.c.b16 %v535, %v533
      %v596 = vpack.c.b16 %v538, %v536
      %v597 = vpack.c.b16 %v539, %v537
      %v598 = vpack.c.b16 %v542, %v540
      %v599 = vpack.c.b16 %v543, %v541
      %v600 = vpack.c.b16 %v546, %v544
      %v601 = vpack.c.b16 %v547, %v545
      %v602 = vpack.c.b16 %v550, %v548
      %v603 = vpack.c.b16 %v551, %v549
      %v604 = vpack.c.b16 %v554, %v552
      %v605 = vpack.c.b16 %v555, %v553
      %v606 = vpack.c.b16 %v558, %v556
      %v607 = vpack.c.b16 %v559, %v557
      %v608 = vpack.c.b16 %v562, %v560
      %v609 = vpack.c.b16 %v563, %v561
      %v610 = vpack.c.b16 %v566, %v564
      %v611 = vpack.c.b16 %v567, %v565
      %v612 = vpack.c.b16 %v570, %v568
      %v613 = vpack.c.b16 %v571, %v569
      %v614 = vpack.c.b16 %v574, %v572
      %v615 = vpack.c.b16 %v575, %v573
      %v616 = vpack.c.b16 %v578, %v576
      %v617 = vpack.c.b16 %v579, %v577
      %v618 = vpack.c.b16 %v582, %v580
      %v619 = vpack.c.b16 %v583, %v581
      %v620 = vpack.c.b16 %v586, %v584
      %v621 = vpack.c.b16 %v587, %v585
      %v622 = vpack.c.b16 %v590, %v588
      %v623 = vpack.c.b16 %v591, %v589
      %656 = vmatprep.subr.bf16.mxu0 %v593
      %657 = vmatpush1.bf16.msra.mxu0 %v592
      %658 = vmatprep.subr.bf16.mxu0 %v595
      %659 = vmatpush1.bf16.msra.mxu0 %v594
      %660 = vmatprep.subr.bf16.mxu0 %v597
      %661 = vmatpush1.bf16.msra.mxu0 %v596
      %662 = vmatprep.subr.bf16.mxu0 %v599
      %663 = vmatpush1.bf16.msra.mxu0 %v598
      %664 = vmatprep.subr.bf16.mxu0 %v601
      %665 = vmatpush1.bf16.msra.mxu0 %v600
      %666 = vmatprep.subr.bf16.mxu0 %v603
      %667 = vmatpush1.bf16.msra.mxu0 %v602
      %668 = vmatprep.subr.bf16.mxu0 %v605
      %669 = vmatpush1.bf16.msra.mxu0 %v604
      %670 = vmatprep.subr.bf16.mxu0 %v607
      %671 = vmatpush1.bf16.msra.mxu0 %v606
      %672 = vmatprep.subr.bf16.mxu0 %v609
      %673 = vmatpush1.bf16.msra.mxu0 %v608
      %674 = vmatprep.subr.bf16.mxu0 %v611
      %675 = vmatpush1.bf16.msra.mxu0 %v610
      %676 = vmatprep.subr.bf16.mxu0 %v613
      %677 = vmatpush1.bf16.msra.mxu0 %v612
      %678 = vmatprep.subr.bf16.mxu0 %v615
      %679 = vmatpush1.bf16.msra.mxu0 %v614
      %680 = vmatprep.subr.bf16.mxu0 %v617
      %681 = vmatpush1.bf16.msra.mxu0 %v616
      %682 = vmatprep.subr.bf16.mxu0 %v619
      %683 = vmatpush1.bf16.msra.mxu0 %v618
      %684 = vmatprep.subr.bf16.mxu0 %v621
      %685 = vmatpush1.bf16.msra.mxu0 %v620
      %686 = vmatprep.subr.bf16.mxu0 %v623
      %687 = vmatpush1.bf16.msra.mxu0 %v622
      %688 = vmatprep.mubr.bf16.mxu0 %v455
      %689 = vmatmul.mubr.bf16.gmra.mrb[0].mxu0 %v454
      %v690 = vpop.f32.mrb[0].mxu0
      %v691 = vadd.f32 %v491, %v690
      %v692 = vpop.f32.mrb[0].mxu0
      %v693 = vadd.f32 %v495, %v692
      %v694 = vpop.f32.mrb[0].mxu0
      %v695 = vpop.f32.mrb[0].mxu0
      %696 = vdwg.mxu0
      %v697 = vadd.f32 %v691, %v693
      %698 = vadd.xlane.f32.xlu0 %v697
      %v699 = vpop.xlane.xlu0 %698
      %v700 = vmul.f32 %v699, %v418
      %v701 = vsub.f32 %v691, %v700
      %v702 = vsub.f32 %v693, %v700
      %v703 = vmul.f32 %v701, %v701
      %v704 = vmul.f32 %v702, %v702
      %v705 = vadd.f32 %v703, %v704
      %706 = vadd.xlane.f32.xlu0 %v705
      %v707 = vpop.xlane.xlu0 %706
      %v708 = vmul.f32 %v707, %v418
      %v709 = vadd.f32 %v708, 1e-05
      %v710 = vrsqrt.pop %v709
      %v711 = vmul.f32 %v701, %v710
      %v712 = vmul.f32 %v702, %v710
      %v713 = vlaneseq
      %v714 = vshrl.u32 %v713, 7
      %v715 = vsub.s32 4, %v714
      %v716 = vrot.slane %v345, %v715
      %v717 = vlaneseq
      %v718 = vshrl.u32 %v717, 7
      %v719 = vsub.s32 4, %v718
      %v720 = vrot.slane %v346, %v719
      %v721 = vmul.f32 %v711, %v716
      %v722 = vmul.f32 %v712, %v720
      %v723 = vlaneseq
      %v724 = vshrl.u32 %v723, 7
      %v725 = vsub.s32 5, %v724
      %v726 = vrot.slane %v345, %v725
      %v727 = vlaneseq
      %v728 = vshrl.u32 %v727, 7
      %v729 = vsub.s32 5, %v728
      %v730 = vrot.slane %v346, %v729
      %v731 = vadd.f32 %v721, %v726
      %v732 = vadd.f32 %v722, %v730
      %v733 = vmax.f32 %v731, 0.0
      %v734 = vmax.f32 %v732, 0.0
      %v735 = vpack.c.bf16 %v733, %v733
      %v736 = vpack.c.bf16 %v734, %v734
      %738 = vset.pattern.permute.xlu0 0
      %739 = vperm.xlu0 %738, %v345
      %v740 = vpop.permute.xlu0 %739
      %v743 = vrot.slane %v347, 3
      %v744 = vrot.slane %v348, 3
      %v747 = vrot.slane %v740, 7
      %749 = vmatprep.subr.bf16.mxu0 %v736
      %750 = vmatpush1.bf16.xpose.msra.mxu0 %v735
      %751 = vmatprep.subr.bf16.mxu0 0
      %752 = vmatpush1.bf16.xpose.msra.mxu0 0
      %753 = vmatprep.subr.bf16.mxu0 0
      %754 = vmatpush1.bf16.xpose.msra.mxu0 0
      %755 = vmatprep.subr.bf16.mxu0 0
      %756 = vmatpush1.bf16.xpose.msra.mxu0 0
      %757 = vmatprep.subr.bf16.mxu0 0
      %758 = vmatpush1.bf16.xpose.msra.mxu0 0
      %759 = vmatprep.subr.bf16.mxu0 0
      %760 = vmatpush1.bf16.xpose.msra.mxu0 0
      %761 = vmatprep.subr.bf16.mxu0 0
      %762 = vmatpush1.bf16.xpose.msra.mxu0 0
      %763 = vmatprep.subr.bf16.mxu0 0
      %764 = vmatpush1.bf16.xpose.msra.mxu0 0
      %765 = vmatprep.subr.bf16.mxu0 0
      %766 = vmatpush1.bf16.xpose.msra.mxu0 0
      %767 = vmatprep.subr.bf16.mxu0 0
      %768 = vmatpush1.bf16.xpose.msra.mxu0 0
      %769 = vmatprep.subr.bf16.mxu0 0
      %770 = vmatpush1.bf16.xpose.msra.mxu0 0
      %771 = vmatprep.subr.bf16.mxu0 0
      %772 = vmatpush1.bf16.xpose.msra.mxu0 0
      %773 = vmatprep.subr.bf16.mxu0 0
      %774 = vmatpush1.bf16.xpose.msra.mxu0 0
      %775 = vmatprep.subr.bf16.mxu0 0
      %776 = vmatpush1.bf16.xpose.msra.mxu0 0
      %777 = vmatprep.subr.bf16.mxu0 0
      %778 = vmatpush1.bf16.xpose.msra.mxu0 0
      %779 = vmatprep.subr.bf16.mxu0 0
      %780 = vmatpush1.bf16.xpose.msra.mxu0 0
      %781 = vmatprep.mubr.bf16.mxu0 %v744
      %782 = vmatmul.mubr.bf16.gmra.mrb[0].mxu0 %v743
      %v783 = vpop.f32.mrb[0].mxu0
      %v784 = vadd.f32 %v747, %v783
      %v785 = vpop.f32.mrb[0].mxu0
      %v786 = vpop.f32.mrb[0].mxu0
      %v787 = vpop.f32.mrb[0].mxu0
      %788 = vdwg.mxu0
      %vm789 = vcmask 57344
      %790 = vst.msk [vmem:[#allocation13] sm:$0x1] %vm789, %v784
    $region49: #{tpu_custom_call.1} parent=1 // pred_fallthru
      _
    // Predicated region
    $region50: #{tpu_custom_call.1} parent=1 // pred_check
      _
    $region51: #{tpu_custom_call.1} parent=1 // pred_check_branch
      %792 = sbr.rel (0) target = $region53
    $region52: #{tpu_custom_call.1} parent=1 // pred_region
      _
    $region53: #{tpu_custom_call.1} parent=1 // pred_fallthru
      _
    // Predicated region
    $region54: #{tpu_custom_call.1} parent=1 // pred_check
      _
    $region55: #{tpu_custom_call.1} parent=1 // pred_check_branch
      %794 = sbr.rel (0) target = $region57
    $region56: #{tpu_custom_call.1} parent=1 // pred_region
      %s796 = ssub.s32 16, 16
      %797 = vsyncadd [#allocation6], %s796
      %s799 = sshll.u32 [#allocation13], 4
      %s800 = int_to_ptr.vmem [resolvable:$true] %s799
      %802 = dma.vmem_to_hbm [thread:$0]  %s800, 16, %s7, [#allocation6]
    $region57: #{tpu_custom_call.1} parent=1 // pred_fallthru
      _
    // Predicated region
    $region58: #{tpu_custom_call.1} parent=1 // pred_check
      _
    $region59: #{tpu_custom_call.1} parent=1 // pred_check_branch
      %804 = sbr.rel (0) target = $region61
    $region60: #{tpu_custom_call.1} parent=1 // pred_region
      _
    $region61: #{tpu_custom_call.1} parent=1 // pred_fallthru
      _
    // Predicated region
    $region62: #{tpu_custom_call.1} parent=1 // pred_check
      _
    $region63: #{tpu_custom_call.1} parent=1 // pred_check_branch
      %806 = sbr.rel (0) target = $region65
    $region64: #{tpu_custom_call.1} parent=1 // pred_region
      %807 = dma.done [#allocation6], 16
    $region65: #{tpu_custom_call.1} parent=1 // pred_fallthru
      _
    %808 = vsyncpa [#allocation5], 1
    %809 = vsyncpa [#allocation8], 1
    %810 = vsyncpa [#allocation11], 1
    %811 = vsyncpa [#allocation6], 1

</llo_original>
